<compile_context>
chip_gen: v5e
topology: v5e:2x2
jax: 0.10.0
libtpu: 0.0.40
codegen_flags: <defaults>
</compile_context>

<pallas_src>
import jax
import jax.numpy as jnp
from jax import lax
from jax.experimental import pallas as pl
from jax.experimental.pallas import tpu as pltpu  # noqa: F401  (TPU backend)


# ------------------------------ fused kernel -------------------------------

def _fused_kernel(p_sst_ref, wall_sst_ref, b_sst_ref,
                  p_ssh_ref, wall_ssh_ref, b_ssh_ref,
                  w4_sst_ref, w4_ssh_ref, b_fc1_ref,
                  w_fc2_ref, b_fc2_ref, out_ref):
    """Whole forward pass in one kernel; everything lives in VMEM/vregs."""
    B = p_sst_ref.shape[0]          # batch
    C = b_sst_ref.shape[0]          # conv_channels
    FEAT = b_fc1_ref.shape[1]       # args.features

    def pooled_act(p_ref, wall_ref, bias_ref, b):
        # conv for all 4 pool taps in a single MXU matmul: (4C, 16Cin) @ (16Cin, S)
        z = jnp.dot(wall_ref[...], p_ref[b],
                    preferred_element_type=jnp.float32)          # (4C, S) f32
        # 2x2 max pool == elementwise max over the 4 tap blocks (8-aligned rows)
        m = jnp.maximum(jnp.maximum(z[0:C], z[C:2 * C]),
                        jnp.maximum(z[2 * C:3 * C], z[3 * C:4 * C]))
        # bias + tanh commute with max (same bias per tap, tanh monotone)
        return jnp.tanh(m + bias_ref[...])                        # (C, S) f32

    rows = []
    for b in range(B):  # tiny static batch, unrolled
        a_sst = pooled_act(p_sst_ref, wall_sst_ref, b_sst_ref, b)
        a_ssh = pooled_act(p_ssh_ref, wall_ssh_ref, b_ssh_ref, b)
        # fc1 restructured: Q[c, c'*FEAT+f] = sum_s A[c,s] * Wfc1[c'*S+s, f];
        # summing the c==c' diagonal blocks gives the exact PyTorch flatten order
        # (the permutation is baked into W4 at trace time).
        q_sst = jnp.dot(a_sst.astype(jnp.bfloat16), w4_sst_ref[...],
                        preferred_element_type=jnp.float32)       # (C, C*FEAT)
        q_ssh = jnp.dot(a_ssh.astype(jnp.bfloat16), w4_ssh_ref[...],
                        preferred_element_type=jnp.float32)
        acc = b_fc1_ref[...]                                      # (1, FEAT)
        for c in range(C):
            acc = acc + q_sst[c:c + 1, c * FEAT:(c + 1) * FEAT] \
                      + q_ssh[c:c + 1, c * FEAT:(c + 1) * FEAT]
        rows.append(acc)

    fc1 = jnp.concatenate(rows, axis=0)                           # (B, FEAT)
    y = jnp.dot(fc1.astype(jnp.bfloat16), w_fc2_ref[...],
                preferred_element_type=jnp.float32) + b_fc2_ref[...]
    out_ref[...] = y.astype(out_ref.dtype)


# --------------------------- trace-time preparation ------------------------

def _prep_conv_branch(x, w):
    """x: (B,Cin,H,W) NCHW input; w: (Cout,Cin,3,3) PyTorch Conv2d weight.

    Returns:
      pext (B, 16*Cin, Ho*Wo) bf16 : strided im2col; pext[b, cin*16+a*4+bb, ho*Wo+wo]
                                     = xpad[b, cin, 2ho+a, 2wo+bb]
      wall (4*Cout, 16*Cin)   bf16 : 3x3 kernel placed at the 4 pool-tap offsets,
    so that max over the 4 Cout-row blocks of (wall @ pext[b]) equals the
    2x2-maxpooled (pre-bias) conv output in (c, ho*Wo+wo) layout.
    """
    B, Cin, H, W = x.shape
    Cout = w.shape[0]
    Ho, Wo = H // 2, W // 2
    xpad = jnp.pad(x, ((0, 0), (0, 0), (1, 1), (1, 1)))           # (B,Cin,H+2,W+2)

    slices = [xpad[:, :, a:a + 2 * Ho:2, bb:bb + 2 * Wo:2]        # (B,Cin,Ho,Wo)
              for a in range(4) for bb in range(4)]
    pext = jnp.stack(slices, axis=0)                              # (16,B,Cin,Ho,Wo)
    pext = jnp.transpose(pext, (1, 2, 0, 3, 4))                   # (B,Cin,16,Ho,Wo)
    pext = pext.reshape(B, Cin * 16, Ho * Wo).astype(jnp.bfloat16)

    walls = []
    for dh in range(2):
        for dw in range(2):
            wp = jnp.pad(w, ((0, 0), (0, 0), (dh, 1 - dh), (dw, 1 - dw)))
            walls.append(wp.reshape(Cout, Cin * 16))              # (Cout, 16Cin)
    wall = jnp.concatenate(walls, axis=0).astype(jnp.bfloat16)    # (4Cout, 16Cin)
    return pext, wall


def _prep_fc1_branch(w_fc1, branch, C, S, feat):
    """Permute fc1 rows (trace-time, weight-side only) for one conv branch.

    Output W4 (S, C*feat) with W4[s, c*feat+f] equal to the fc1 weight that
    multiplies pooled activation (c, s) of this branch under PyTorch's
    view(B,12,-1) / cat(dim=2) / flatten ordering.
    """
    rw = (C * S) // 12                         # per-branch row width of view(B,12,-1)
    q = jnp.arange(C * S)                      # index in (c, s) order: q = c*S + s
    torch_idx = (q // rw) * (2 * rw) + branch * rw + (q % rw)
    w_br = w_fc1[torch_idx, :]                 # (C*S, feat), rows in (c, s) order
    w4 = jnp.transpose(w_br.reshape(C, S, feat), (1, 0, 2)).reshape(S, C * feat)
    return w4.astype(jnp.bfloat16)


# ------------------------------- forward pass -------------------------------

@jax.jit
def total_module_forward(params, sstA, sshA):
    B, _, H, W = sstA.shape
    C = params["w_sst"].shape[0]
    S = (H // 2) * (W // 2)
    feat = params["b_fc1"].shape[0]
    n_out = params["b_fc2"].shape[0]

    p_sst, wall_sst = _prep_conv_branch(sstA, params["w_sst"])
    p_ssh, wall_ssh = _prep_conv_branch(sshA, params["w_ssh"])
    w4_sst = _prep_fc1_branch(params["w_fc1"], 0, C, S, feat)
    w4_ssh = _prep_fc1_branch(params["w_fc1"], 1, C, S, feat)

    # Single fused pallas_call, no grid: every operand is a single full-array
    # VMEM block (total working set < 200 KiB, fine even for v7x's 64 MiB VMEM).
    return pl.pallas_call(
        _fused_kernel,
        out_shape=jax.ShapeDtypeStruct((B, n_out), jnp.float32),
    )(p_sst, wall_sst, params["b_sst"].reshape(C, 1).astype(jnp.float32),
      p_ssh, wall_ssh, params["b_ssh"].reshape(C, 1).astype(jnp.float32),
      w4_sst, w4_ssh,
      params["b_fc1"].reshape(1, feat).astype(jnp.float32),
      params["w_fc2"].astype(jnp.bfloat16),
      params["b_fc2"].reshape(1, n_out).astype(jnp.float32))


# --------------------------- pure-JAX f32 reference -------------------------

def _reference_forward(params, sstA, sshA):
    def cnn(x, w, b):
        y = lax.conv_general_dilated(
            x, w, window_strides=(1, 1), padding="SAME",
            dimension_numbers=("NCHW", "OIHW", "NCHW"))
        y = jnp.tanh(y + b[None, :, None, None])
        return lax.reduce_window(y, -jnp.inf, lax.max,
                                 (1, 1, 2, 2), (1, 1, 2, 2), "VALID")

    x1 = cnn(sstA, params["w_sst"], params["b_sst"])
    x2 = cnn(sshA, params["w_ssh"], params["b_ssh"])
    B = x1.shape[0]
    x = jnp.concatenate([x1.reshape(B, 12, -1), x2.reshape(B, 12, -1)], axis=2)
    x = x.reshape(B, -1)
    x = x @ params["w_fc1"] + params["b_fc1"]
    return x @ params["w_fc2"] + params["b_fc2"]


# ---------------------------------- main ------------------------------------

if __name__ == "__main__":
    key = jax.random.PRNGKey(0)
    ks = jax.random.split(key, 10)

    B, Cin, H, W = 2, 4, 12, 36     # spatial so that conv+pool -> 6x18
    C = 8                           # args.conv_channels
    FEAT = 32                       # args.features

    params = {
        "w_sst": 0.1 * jax.random.normal(ks[0], (C, Cin, 3, 3), jnp.float32),
        "b_sst": 0.1 * jax.random.normal(ks[1], (C,), jnp.float32),
        "w_ssh": 0.1 * jax.random.normal(ks[2], (C, Cin, 3, 3), jnp.float32),
        "b_ssh": 0.1 * jax.random.normal(ks[3], (C,), jnp.float32),
        # fc weights stored as (in, out); applied as x @ w + b (== nn.Linear).
        "w_fc1": 0.05 * jax.random.normal(ks[4], (C * 2 * 6 * 18, FEAT),
                                          jnp.float32),
        "b_fc1": 0.05 * jax.random.normal(ks[5], (FEAT,), jnp.float32),
        "w_fc2": 0.05 * jax.random.normal(ks[6], (FEAT, 12), jnp.float32),
        "b_fc2": 0.05 * jax.random.normal(ks[7], (12,), jnp.float32),
    }

    sstA = jax.random.normal(ks[8], (B, Cin, H, W), jnp.float32)
    sshA = jax.random.normal(ks[9], (B, Cin, H, W), jnp.float32)

    y = jax.block_until_ready(total_module_forward(params, sstA, sshA))
    assert y.shape == (B, 12), y.shape
    assert bool(jnp.all(jnp.isfinite(y)))

    # loose tolerance: kernel uses bf16 matmul operands with f32 accumulation
    y_ref = _reference_forward(params, sstA, sshA)
    assert bool(jnp.allclose(y, y_ref, atol=1e-1, rtol=1e-1)), (y, y_ref)

    print("KERNEL_OK")
</pallas_src>

<mosaic_0001>
module attributes {stable_mosaic.version = 11 : i64} {
  func.func @_fused_kernel(%arg0: memref<2x64x108xbf16, #tpu.memory_space<vmem>>, %arg1: memref<32x64xbf16, #tpu.memory_space<vmem>>, %arg2: memref<8x1xf32, #tpu.memory_space<vmem>>, %arg3: memref<2x64x108xbf16, #tpu.memory_space<vmem>>, %arg4: memref<32x64xbf16, #tpu.memory_space<vmem>>, %arg5: memref<8x1xf32, #tpu.memory_space<vmem>>, %arg6: memref<108x256xbf16, #tpu.memory_space<vmem>>, %arg7: memref<108x256xbf16, #tpu.memory_space<vmem>>, %arg8: memref<1x32xf32, #tpu.memory_space<vmem>>, %arg9: memref<32x12xbf16, #tpu.memory_space<vmem>>, %arg10: memref<1x12xf32, #tpu.memory_space<vmem>>, %arg11: memref<2x12xf32, #tpu.memory_space<vmem>>) attributes {dimension_semantics = [], scalar_prefetch = 0 : i64, scratch_operands = 0 : i64, tpu.core_type = #tpu.core_type<tc>} {
    %c0 = arith.constant 0 : index
    %c0_0 = arith.constant 0 : index
    %0 = vector.load %arg1[%c0, %c0_0] : memref<32x64xbf16, #tpu.memory_space<vmem>>, vector<32x64xbf16>
    %c0_1 = arith.constant 0 : index
    %c0_2 = arith.constant 0 : index
    %c0_3 = arith.constant 0 : index
    %1 = vector.load %arg0[%c0_1, %c0_2, %c0_3] : memref<2x64x108xbf16, #tpu.memory_space<vmem>>, vector<1x64x108xbf16>
    %2 = vector.shape_cast %1 : vector<1x64x108xbf16> to vector<64x108xbf16>
    %cst = arith.constant dense<0.000000e+00> : vector<32x108xf32>
    %3 = tpu.matmul %0, %2, %cst {dimension_numbers = #tpu.dot_dimension_numbers<[1], [0], [0], [1], [0, 0, 1, 1], [], []>} : vector<32x64xbf16>, vector<64x108xbf16>, vector<32x108xf32> -> vector<32x108xf32>
    %4 = vector.extract_strided_slice %3 {offsets = [0, 0], sizes = [8, 108], strides = [1, 1]} : vector<32x108xf32> to vector<8x108xf32>
    %5 = vector.extract_strided_slice %3 {offsets = [8, 0], sizes = [8, 108], strides = [1, 1]} : vector<32x108xf32> to vector<8x108xf32>
    %6 = arith.maximumf %4, %5 : vector<8x108xf32>
    %7 = vector.extract_strided_slice %3 {offsets = [16, 0], sizes = [8, 108], strides = [1, 1]} : vector<32x108xf32> to vector<8x108xf32>
    %8 = vector.extract_strided_slice %3 {offsets = [24, 0], sizes = [8, 108], strides = [1, 1]} : vector<32x108xf32> to vector<8x108xf32>
    %9 = arith.maximumf %7, %8 : vector<8x108xf32>
    %10 = arith.maximumf %6, %9 : vector<8x108xf32>
    %c0_4 = arith.constant 0 : index
    %c0_5 = arith.constant 0 : index
    %11 = vector.load %arg2[%c0_4, %c0_5] : memref<8x1xf32, #tpu.memory_space<vmem>>, vector<8x1xf32>
    %12 = vector.broadcast %11 : vector<8x1xf32> to vector<8x108xf32>
    %13 = arith.addf %10, %12 : vector<8x108xf32>
    %14 = math.tanh %13 : vector<8x108xf32>
    %c0_6 = arith.constant 0 : index
    %c0_7 = arith.constant 0 : index
    %15 = vector.load %arg4[%c0_6, %c0_7] : memref<32x64xbf16, #tpu.memory_space<vmem>>, vector<32x64xbf16>
    %c0_8 = arith.constant 0 : index
    %c0_9 = arith.constant 0 : index
    %c0_10 = arith.constant 0 : index
    %16 = vector.load %arg3[%c0_8, %c0_9, %c0_10] : memref<2x64x108xbf16, #tpu.memory_space<vmem>>, vector<1x64x108xbf16>
    %17 = vector.shape_cast %16 : vector<1x64x108xbf16> to vector<64x108xbf16>
    %cst_11 = arith.constant dense<0.000000e+00> : vector<32x108xf32>
    %18 = tpu.matmul %15, %17, %cst_11 {dimension_numbers = #tpu.dot_dimension_numbers<[1], [0], [0], [1], [0, 0, 1, 1], [], []>} : vector<32x64xbf16>, vector<64x108xbf16>, vector<32x108xf32> -> vector<32x108xf32>
    %19 = vector.extract_strided_slice %18 {offsets = [0, 0], sizes = [8, 108], strides = [1, 1]} : vector<32x108xf32> to vector<8x108xf32>
    %20 = vector.extract_strided_slice %18 {offsets = [8, 0], sizes = [8, 108], strides = [1, 1]} : vector<32x108xf32> to vector<8x108xf32>
    %21 = arith.maximumf %19, %20 : vector<8x108xf32>
    %22 = vector.extract_strided_slice %18 {offsets = [16, 0], sizes = [8, 108], strides = [1, 1]} : vector<32x108xf32> to vector<8x108xf32>
    %23 = vector.extract_strided_slice %18 {offsets = [24, 0], sizes = [8, 108], strides = [1, 1]} : vector<32x108xf32> to vector<8x108xf32>
    %24 = arith.maximumf %22, %23 : vector<8x108xf32>
    %25 = arith.maximumf %21, %24 : vector<8x108xf32>
    %c0_12 = arith.constant 0 : index
    %c0_13 = arith.constant 0 : index
    %26 = vector.load %arg5[%c0_12, %c0_13] : memref<8x1xf32, #tpu.memory_space<vmem>>, vector<8x1xf32>
    %27 = vector.broadcast %26 : vector<8x1xf32> to vector<8x108xf32>
    %28 = arith.addf %25, %27 : vector<8x108xf32>
    %29 = math.tanh %28 : vector<8x108xf32>
    %30 = arith.truncf %14 : vector<8x108xf32> to vector<8x108xbf16>
    %c0_14 = arith.constant 0 : index
    %c0_15 = arith.constant 0 : index
    %31 = vector.load %arg6[%c0_14, %c0_15] : memref<108x256xbf16, #tpu.memory_space<vmem>>, vector<108x256xbf16>
    %cst_16 = arith.constant dense<0.000000e+00> : vector<8x256xf32>
    %32 = tpu.matmul %30, %31, %cst_16 {dimension_numbers = #tpu.dot_dimension_numbers<[1], [0], [0], [1], [0, 0, 1, 1], [], []>} : vector<8x108xbf16>, vector<108x256xbf16>, vector<8x256xf32> -> vector<8x256xf32>
    %33 = arith.truncf %29 : vector<8x108xf32> to vector<8x108xbf16>
    %c0_17 = arith.constant 0 : index
    %c0_18 = arith.constant 0 : index
    %34 = vector.load %arg7[%c0_17, %c0_18] : memref<108x256xbf16, #tpu.memory_space<vmem>>, vector<108x256xbf16>
    %cst_19 = arith.constant dense<0.000000e+00> : vector<8x256xf32>
    %35 = tpu.matmul %33, %34, %cst_19 {dimension_numbers = #tpu.dot_dimension_numbers<[1], [0], [0], [1], [0, 0, 1, 1], [], []>} : vector<8x108xbf16>, vector<108x256xbf16>, vector<8x256xf32> -> vector<8x256xf32>
    %c0_20 = arith.constant 0 : index
    %c0_21 = arith.constant 0 : index
    %36 = vector.load %arg8[%c0_20, %c0_21] : memref<1x32xf32, #tpu.memory_space<vmem>>, vector<1x32xf32>
    %37 = vector.extract_strided_slice %32 {offsets = [0, 0], sizes = [1, 32], strides = [1, 1]} : vector<8x256xf32> to vector<1x32xf32>
    %38 = arith.addf %36, %37 : vector<1x32xf32>
    %39 = vector.extract_strided_slice %35 {offsets = [0, 0], sizes = [1, 32], strides = [1, 1]} : vector<8x256xf32> to vector<1x32xf32>
    %40 = arith.addf %38, %39 : vector<1x32xf32>
    %41 = vector.extract_strided_slice %32 {offsets = [1, 32], sizes = [1, 32], strides = [1, 1]} : vector<8x256xf32> to vector<1x32xf32>
    %42 = arith.addf %40, %41 : vector<1x32xf32>
    %43 = vector.extract_strided_slice %35 {offsets = [1, 32], sizes = [1, 32], strides = [1, 1]} : vector<8x256xf32> to vector<1x32xf32>
    %44 = arith.addf %42, %43 : vector<1x32xf32>
    %45 = vector.extract_strided_slice %32 {offsets = [2, 64], sizes = [1, 32], strides = [1, 1]} : vector<8x256xf32> to vector<1x32xf32>
    %46 = arith.addf %44, %45 : vector<1x32xf32>
    %47 = vector.extract_strided_slice %35 {offsets = [2, 64], sizes = [1, 32], strides = [1, 1]} : vector<8x256xf32> to vector<1x32xf32>
    %48 = arith.addf %46, %47 : vector<1x32xf32>
    %49 = vector.extract_strided_slice %32 {offsets = [3, 96], sizes = [1, 32], strides = [1, 1]} : vector<8x256xf32> to vector<1x32xf32>
    %50 = arith.addf %48, %49 : vector<1x32xf32>
    %51 = vector.extract_strided_slice %35 {offsets = [3, 96], sizes = [1, 32], strides = [1, 1]} : vector<8x256xf32> to vector<1x32xf32>
    %52 = arith.addf %50, %51 : vector<1x32xf32>
    %53 = vector.extract_strided_slice %32 {offsets = [4, 128], sizes = [1, 32], strides = [1, 1]} : vector<8x256xf32> to vector<1x32xf32>
    %54 = arith.addf %52, %53 : vector<1x32xf32>
    %55 = vector.extract_strided_slice %35 {offsets = [4, 128], sizes = [1, 32], strides = [1, 1]} : vector<8x256xf32> to vector<1x32xf32>
    %56 = arith.addf %54, %55 : vector<1x32xf32>
    %57 = vector.extract_strided_slice %32 {offsets = [5, 160], sizes = [1, 32], strides = [1, 1]} : vector<8x256xf32> to vector<1x32xf32>
    %58 = arith.addf %56, %57 : vector<1x32xf32>
    %59 = vector.extract_strided_slice %35 {offsets = [5, 160], sizes = [1, 32], strides = [1, 1]} : vector<8x256xf32> to vector<1x32xf32>
    %60 = arith.addf %58, %59 : vector<1x32xf32>
    %61 = vector.extract_strided_slice %32 {offsets = [6, 192], sizes = [1, 32], strides = [1, 1]} : vector<8x256xf32> to vector<1x32xf32>
    %62 = arith.addf %60, %61 : vector<1x32xf32>
    %63 = vector.extract_strided_slice %35 {offsets = [6, 192], sizes = [1, 32], strides = [1, 1]} : vector<8x256xf32> to vector<1x32xf32>
    %64 = arith.addf %62, %63 : vector<1x32xf32>
    %65 = vector.extract_strided_slice %32 {offsets = [7, 224], sizes = [1, 32], strides = [1, 1]} : vector<8x256xf32> to vector<1x32xf32>
    %66 = arith.addf %64, %65 : vector<1x32xf32>
    %67 = vector.extract_strided_slice %35 {offsets = [7, 224], sizes = [1, 32], strides = [1, 1]} : vector<8x256xf32> to vector<1x32xf32>
    %68 = arith.addf %66, %67 : vector<1x32xf32>
    %c0_22 = arith.constant 0 : index
    %c0_23 = arith.constant 0 : index
    %69 = vector.load %arg1[%c0_22, %c0_23] : memref<32x64xbf16, #tpu.memory_space<vmem>>, vector<32x64xbf16>
    %c1 = arith.constant 1 : index
    %c0_24 = arith.constant 0 : index
    %c0_25 = arith.constant 0 : index
    %70 = vector.load %arg0[%c1, %c0_24, %c0_25] : memref<2x64x108xbf16, #tpu.memory_space<vmem>>, vector<1x64x108xbf16>
    %71 = vector.shape_cast %70 : vector<1x64x108xbf16> to vector<64x108xbf16>
    %cst_26 = arith.constant dense<0.000000e+00> : vector<32x108xf32>
    %72 = tpu.matmul %69, %71, %cst_26 {dimension_numbers = #tpu.dot_dimension_numbers<[1], [0], [0], [1], [0, 0, 1, 1], [], []>} : vector<32x64xbf16>, vector<64x108xbf16>, vector<32x108xf32> -> vector<32x108xf32>
    %73 = vector.extract_strided_slice %72 {offsets = [0, 0], sizes = [8, 108], strides = [1, 1]} : vector<32x108xf32> to vector<8x108xf32>
    %74 = vector.extract_strided_slice %72 {offsets = [8, 0], sizes = [8, 108], strides = [1, 1]} : vector<32x108xf32> to vector<8x108xf32>
    %75 = arith.maximumf %73, %74 : vector<8x108xf32>
    %76 = vector.extract_strided_slice %72 {offsets = [16, 0], sizes = [8, 108], strides = [1, 1]} : vector<32x108xf32> to vector<8x108xf32>
    %77 = vector.extract_strided_slice %72 {offsets = [24, 0], sizes = [8, 108], strides = [1, 1]} : vector<32x108xf32> to vector<8x108xf32>
    %78 = arith.maximumf %76, %77 : vector<8x108xf32>
    %79 = arith.maximumf %75, %78 : vector<8x108xf32>
    %c0_27 = arith.constant 0 : index
    %c0_28 = arith.constant 0 : index
    %80 = vector.load %arg2[%c0_27, %c0_28] : memref<8x1xf32, #tpu.memory_space<vmem>>, vector<8x1xf32>
    %81 = vector.broadcast %80 : vector<8x1xf32> to vector<8x108xf32>
    %82 = arith.addf %79, %81 : vector<8x108xf32>
    %83 = math.tanh %82 : vector<8x108xf32>
    %c0_29 = arith.constant 0 : index
    %c0_30 = arith.constant 0 : index
    %84 = vector.load %arg4[%c0_29, %c0_30] : memref<32x64xbf16, #tpu.memory_space<vmem>>, vector<32x64xbf16>
    %c1_31 = arith.constant 1 : index
    %c0_32 = arith.constant 0 : index
    %c0_33 = arith.constant 0 : index
    %85 = vector.load %arg3[%c1_31, %c0_32, %c0_33] : memref<2x64x108xbf16, #tpu.memory_space<vmem>>, vector<1x64x108xbf16>
    %86 = vector.shape_cast %85 : vector<1x64x108xbf16> to vector<64x108xbf16>
    %cst_34 = arith.constant dense<0.000000e+00> : vector<32x108xf32>
    %87 = tpu.matmul %84, %86, %cst_34 {dimension_numbers = #tpu.dot_dimension_numbers<[1], [0], [0], [1], [0, 0, 1, 1], [], []>} : vector<32x64xbf16>, vector<64x108xbf16>, vector<32x108xf32> -> vector<32x108xf32>
    %88 = vector.extract_strided_slice %87 {offsets = [0, 0], sizes = [8, 108], strides = [1, 1]} : vector<32x108xf32> to vector<8x108xf32>
    %89 = vector.extract_strided_slice %87 {offsets = [8, 0], sizes = [8, 108], strides = [1, 1]} : vector<32x108xf32> to vector<8x108xf32>
    %90 = arith.maximumf %88, %89 : vector<8x108xf32>
    %91 = vector.extract_strided_slice %87 {offsets = [16, 0], sizes = [8, 108], strides = [1, 1]} : vector<32x108xf32> to vector<8x108xf32>
    %92 = vector.extract_strided_slice %87 {offsets = [24, 0], sizes = [8, 108], strides = [1, 1]} : vector<32x108xf32> to vector<8x108xf32>
    %93 = arith.maximumf %91, %92 : vector<8x108xf32>
    %94 = arith.maximumf %90, %93 : vector<8x108xf32>
    %c0_35 = arith.constant 0 : index
    %c0_36 = arith.constant 0 : index
    %95 = vector.load %arg5[%c0_35, %c0_36] : memref<8x1xf32, #tpu.memory_space<vmem>>, vector<8x1xf32>
    %96 = vector.broadcast %95 : vector<8x1xf32> to vector<8x108xf32>
    %97 = arith.addf %94, %96 : vector<8x108xf32>
    %98 = math.tanh %97 : vector<8x108xf32>
    %99 = arith.truncf %83 : vector<8x108xf32> to vector<8x108xbf16>
    %c0_37 = arith.constant 0 : index
    %c0_38 = arith.constant 0 : index
    %100 = vector.load %arg6[%c0_37, %c0_38] : memref<108x256xbf16, #tpu.memory_space<vmem>>, vector<108x256xbf16>
    %cst_39 = arith.constant dense<0.000000e+00> : vector<8x256xf32>
    %101 = tpu.matmul %99, %100, %cst_39 {dimension_numbers = #tpu.dot_dimension_numbers<[1], [0], [0], [1], [0, 0, 1, 1], [], []>} : vector<8x108xbf16>, vector<108x256xbf16>, vector<8x256xf32> -> vector<8x256xf32>
    %102 = arith.truncf %98 : vector<8x108xf32> to vector<8x108xbf16>
    %c0_40 = arith.constant 0 : index
    %c0_41 = arith.constant 0 : index
    %103 = vector.load %arg7[%c0_40, %c0_41] : memref<108x256xbf16, #tpu.memory_space<vmem>>, vector<108x256xbf16>
    %cst_42 = arith.constant dense<0.000000e+00> : vector<8x256xf32>
    %104 = tpu.matmul %102, %103, %cst_42 {dimension_numbers = #tpu.dot_dimension_numbers<[1], [0], [0], [1], [0, 0, 1, 1], [], []>} : vector<8x108xbf16>, vector<108x256xbf16>, vector<8x256xf32> -> vector<8x256xf32>
    %c0_43 = arith.constant 0 : index
    %c0_44 = arith.constant 0 : index
    %105 = vector.load %arg8[%c0_43, %c0_44] : memref<1x32xf32, #tpu.memory_space<vmem>>, vector<1x32xf32>
    %106 = vector.extract_strided_slice %101 {offsets = [0, 0], sizes = [1, 32], strides = [1, 1]} : vector<8x256xf32> to vector<1x32xf32>
    %107 = arith.addf %105, %106 : vector<1x32xf32>
    %108 = vector.extract_strided_slice %104 {offsets = [0, 0], sizes = [1, 32], strides = [1, 1]} : vector<8x256xf32> to vector<1x32xf32>
    %109 = arith.addf %107, %108 : vector<1x32xf32>
    %110 = vector.extract_strided_slice %101 {offsets = [1, 32], sizes = [1, 32], strides = [1, 1]} : vector<8x256xf32> to vector<1x32xf32>
    %111 = arith.addf %109, %110 : vector<1x32xf32>
    %112 = vector.extract_strided_slice %104 {offsets = [1, 32], sizes = [1, 32], strides = [1, 1]} : vector<8x256xf32> to vector<1x32xf32>
    %113 = arith.addf %111, %112 : vector<1x32xf32>
    %114 = vector.extract_strided_slice %101 {offsets = [2, 64], sizes = [1, 32], strides = [1, 1]} : vector<8x256xf32> to vector<1x32xf32>
    %115 = arith.addf %113, %114 : vector<1x32xf32>
    %116 = vector.extract_strided_slice %104 {offsets = [2, 64], sizes = [1, 32], strides = [1, 1]} : vector<8x256xf32> to vector<1x32xf32>
    %117 = arith.addf %115, %116 : vector<1x32xf32>
    %118 = vector.extract_strided_slice %101 {offsets = [3, 96], sizes = [1, 32], strides = [1, 1]} : vector<8x256xf32> to vector<1x32xf32>
    %119 = arith.addf %117, %118 : vector<1x32xf32>
    %120 = vector.extract_strided_slice %104 {offsets = [3, 96], sizes = [1, 32], strides = [1, 1]} : vector<8x256xf32> to vector<1x32xf32>
    %121 = arith.addf %119, %120 : vector<1x32xf32>
    %122 = vector.extract_strided_slice %101 {offsets = [4, 128], sizes = [1, 32], strides = [1, 1]} : vector<8x256xf32> to vector<1x32xf32>
    %123 = arith.addf %121, %122 : vector<1x32xf32>
    %124 = vector.extract_strided_slice %104 {offsets = [4, 128], sizes = [1, 32], strides = [1, 1]} : vector<8x256xf32> to vector<1x32xf32>
    %125 = arith.addf %123, %124 : vector<1x32xf32>
    %126 = vector.extract_strided_slice %101 {offsets = [5, 160], sizes = [1, 32], strides = [1, 1]} : vector<8x256xf32> to vector<1x32xf32>
    %127 = arith.addf %125, %126 : vector<1x32xf32>
    %128 = vector.extract_strided_slice %104 {offsets = [5, 160], sizes = [1, 32], strides = [1, 1]} : vector<8x256xf32> to vector<1x32xf32>
    %129 = arith.addf %127, %128 : vector<1x32xf32>
    %130 = vector.extract_strided_slice %101 {offsets = [6, 192], sizes = [1, 32], strides = [1, 1]} : vector<8x256xf32> to vector<1x32xf32>
    %131 = arith.addf %129, %130 : vector<1x32xf32>
    %132 = vector.extract_strided_slice %104 {offsets = [6, 192], sizes = [1, 32], strides = [1, 1]} : vector<8x256xf32> to vector<1x32xf32>
    %133 = arith.addf %131, %132 : vector<1x32xf32>
    %134 = vector.extract_strided_slice %101 {offsets = [7, 224], sizes = [1, 32], strides = [1, 1]} : vector<8x256xf32> to vector<1x32xf32>
    %135 = arith.addf %133, %134 : vector<1x32xf32>
    %136 = vector.extract_strided_slice %104 {offsets = [7, 224], sizes = [1, 32], strides = [1, 1]} : vector<8x256xf32> to vector<1x32xf32>
    %137 = arith.addf %135, %136 : vector<1x32xf32>
    %138 = tpu.concatenate %68, %137 in 0 : vector<1x32xf32>, vector<1x32xf32> -> vector<2x32xf32>
    %139 = arith.truncf %138 : vector<2x32xf32> to vector<2x32xbf16>
    %c0_45 = arith.constant 0 : index
    %c0_46 = arith.constant 0 : index
    %140 = vector.load %arg9[%c0_45, %c0_46] : memref<32x12xbf16, #tpu.memory_space<vmem>>, vector<32x12xbf16>
    %cst_47 = arith.constant dense<0.000000e+00> : vector<2x12xf32>
    %141 = tpu.matmul %139, %140, %cst_47 {dimension_numbers = #tpu.dot_dimension_numbers<[1], [0], [0], [1], [0, 0, 1, 1], [], []>} : vector<2x32xbf16>, vector<32x12xbf16>, vector<2x12xf32> -> vector<2x12xf32>
    %c0_48 = arith.constant 0 : index
    %c0_49 = arith.constant 0 : index
    %142 = vector.load %arg10[%c0_48, %c0_49] : memref<1x12xf32, #tpu.memory_space<vmem>>, vector<1x12xf32>
    %143 = vector.broadcast %142 : vector<1x12xf32> to vector<2x12xf32>
    %144 = arith.addf %141, %143 : vector<2x12xf32>
    %c0_50 = arith.constant 0 : index
    %c0_51 = arith.constant 0 : index
    %145 = vector.load %arg11[%c0_50, %c0_51] : memref<2x12xf32, #tpu.memory_space<vmem>>, vector<2x12xf32>
    tpu.vector_store %arg11[%c0_50, %c0_51], %144 {strides = array<i32>} : memref<2x12xf32, #tpu.memory_space<vmem>>, vector<2x12xf32>,
    return
  }
}

</mosaic_0001>

<llo_original>
// kernel: total_module_forward.1
$region0: #{total_module_forward.1}
  #allocation0 [shape = 'u32[]', space=smem, size = 0x4, offset = 0x4, fixed_abs, tag = 'smem constant byte address 0x4 - core index']
  #allocation1 [shape = 'u32[72,128]{1,0:T(1,128)}', space=vmem, size = 0x9000, scoped, tag = 'internal scratch']
  %s0 = inlined_call_operand.vmem [shape: bf16[2,64,108], index: 0, kind: input, shape index: {}]
  %s1 = inlined_call_operand.vmem [shape: bf16[32,64], index: 1, kind: input, shape index: {}]
  %s2 = inlined_call_operand.vmem [shape: f32[8,1], index: 2, kind: input, shape index: {}]
  %s3 = inlined_call_operand.vmem [shape: bf16[2,64,108], index: 3, kind: input, shape index: {}]
  %s4 = inlined_call_operand.vmem [shape: bf16[32,64], index: 4, kind: input, shape index: {}]
  %s5 = inlined_call_operand.vmem [shape: f32[8,1], index: 5, kind: input, shape index: {}]
  %s6 = inlined_call_operand.vmem [shape: bf16[108,256], index: 6, kind: input, shape index: {}]
  %s7 = inlined_call_operand.vmem [shape: bf16[108,256], index: 7, kind: input, shape index: {}]
  %s8 = inlined_call_operand.vmem [shape: f32[1,32], index: 8, kind: input, shape index: {}]
  %s9 = inlined_call_operand.vmem [shape: bf16[32,12], index: 9, kind: input, shape index: {}]
  %s10 = inlined_call_operand.vmem [shape: f32[1,12], index: 10, kind: input, shape index: {}]
  %s11 = inlined_call_operand.hbm [shape: f32[2,12], index: 11, kind: output, shape index: {}]
  %s12 = sld [smem:[#allocation0]]
  $region54: #{total_module_forward.1} parent=0
    _
  %s14 = ssub.s32 1, %s12
  %s15 = scalar_select 0, %s14, %s12
  $region1: #{total_module_forward.1} parent=0
    #allocation2 [shape = 'u8[1024]{0}', space=vmem, size = 0x400, scoped, tag = 'output window, operand 0, single buffered']
    #allocation3 [shape = 's32[1]{0}', space=sflag, size = 0x4, scoped, tag = 'scoped memory for total_module_forward.1']
    %16 = vsyncpa [#allocation3], 0
    // Predicated region
    $region2: #{total_module_forward.1} parent=1 // pred_check
      _
    $region3: #{total_module_forward.1} parent=1 // pred_check_branch
      %18 = sbr.rel (0) target = $region5
    $region4: #{total_module_forward.1} parent=1 // pred_region
      _
    $region5: #{total_module_forward.1} parent=1 // pred_fallthru
      _
    // Predicated region
    $region6: #{total_module_forward.1} parent=1 // pred_check
      _
    $region7: #{total_module_forward.1} parent=1 // pred_check_branch
      %20 = sbr.rel (0) target = $region9
    $region8: #{total_module_forward.1} parent=1 // pred_region
      _
    $region9: #{total_module_forward.1} parent=1 // pred_fallthru
      _
    // Predicated region
    $region10: #{total_module_forward.1} parent=1 // pred_check
      _
    $region11: #{total_module_forward.1} parent=1 // pred_check_branch
      %22 = sbr.rel (0) target = $region13
    $region12: #{total_module_forward.1} parent=1 // pred_region
      _
    $region13: #{total_module_forward.1} parent=1 // pred_fallthru
      _
    // Predicated region
    $region14: #{total_module_forward.1} parent=1 // pred_check
      _
    $region15: #{total_module_forward.1} parent=1 // pred_check_branch
      %24 = sbr.rel (0) target = $region17
    $region16: #{total_module_forward.1} parent=1 // pred_region
      _
    $region17: #{total_module_forward.1} parent=1 // pred_fallthru
      _
    // Predicated region
    $region18: #{total_module_forward.1} parent=1 // pred_check
      _
    $region19: #{total_module_forward.1} parent=1 // pred_check_branch
      %26 = sbr.rel (0) target = $region21
    $region20: #{total_module_forward.1} parent=1 // pred_region
      _
    $region21: #{total_module_forward.1} parent=1 // pred_fallthru
      _
    // Predicated region
    $region22: #{total_module_forward.1} parent=1 // pred_check
      _
    $region23: #{total_module_forward.1} parent=1 // pred_check_branch
      %28 = sbr.rel (0) target = $region25
    $region24: #{total_module_forward.1} parent=1 // pred_region
      _
    $region25: #{total_module_forward.1} parent=1 // pred_fallthru
      _
    // Predicated region
    $region26: #{total_module_forward.1} parent=1 // pred_check
      _
    $region27: #{total_module_forward.1} parent=1 // pred_check_branch
      %30 = sbr.rel (0) target = $region29
    $region28: #{total_module_forward.1} parent=1 // pred_region
      _
    $region29: #{total_module_forward.1} parent=1 // pred_fallthru
      _
    // Predicated region
    $region30: #{total_module_forward.1} parent=1 // pred_check
      _
    $region31: #{total_module_forward.1} parent=1 // pred_check_branch
      %32 = sbr.rel (0) target = $region33
    $region32: #{total_module_forward.1} parent=1 // pred_region
      _
    $region33: #{total_module_forward.1} parent=1 // pred_fallthru
      _
    // Predicated region
    $region34: #{total_module_forward.1} parent=1 // pred_check
      _
    $region35: #{total_module_forward.1} parent=1 // pred_check_branch
      %34 = sbr.rel (0) target = $region37
    $region36: #{total_module_forward.1} parent=1 // pred_region
      _
    $region37: #{total_module_forward.1} parent=1 // pred_fallthru
      _
    // Predicated region
    $region38: #{total_module_forward.1} parent=1 // pred_check
      _
    $region39: #{total_module_forward.1} parent=1 // pred_check_branch
      %36 = sbr.rel (0) target = $region41
    $region40: #{total_module_forward.1} parent=1 // pred_region
      _
    $region41: #{total_module_forward.1} parent=1 // pred_fallthru
      _
    // Predicated region
    $region42: #{total_module_forward.1} parent=1 // pred_check
      _
    $region43: #{total_module_forward.1} parent=1 // pred_check_branch
      %38 = sbr.rel (0) target = $region45
    $region44: #{total_module_forward.1} parent=1 // pred_region
      _
    $region45: #{total_module_forward.1} parent=1 // pred_fallthru
      _
    %v40 = vld [vmem:[%s1] sm:$0xf]
    %v41 = vld [vmem:[%s1 + $0x4] sm:$0xf]
    %v42 = vld [vmem:[%s1 + $0x8] sm:$0xf]
    %v43 = vld [vmem:[%s1 + $0xc] sm:$0xf]
    %v44 = vld [vmem:[%s0] sm:$0xf]
    %v45 = vld [vmem:[%s0 + $0x4] sm:$0xf]
    %v46 = vld [vmem:[%s0 + $0x8] sm:$0xf]
    %v47 = vld [vmem:[%s0 + $0xc] sm:$0xf]
    %v48 = vld [vmem:[%s0 + $0x10] sm:$0xf]
    %v49 = vld [vmem:[%s0 + $0x14] sm:$0xf]
    %v50 = vld [vmem:[%s0 + $0x18] sm:$0xf]
    %v51 = vld [vmem:[%s0 + $0x1c] sm:$0xf]
    %v56 = vunpack.c.l.b16 %v40
    %v57 = vunpack.c.l.b16 %v41
    %v58 = vunpack.c.l.b16 %v42
    %v59 = vunpack.c.l.b16 %v43
    %v60 = vpack.c.b16 %v57, %v56
    %v61 = vpack.c.b16 %v59, %v58
    %v70 = vunpack.c.l.b16 %v44
    %v71 = vunpack.c.l.b16 %v45
    %v72 = vunpack.c.l.b16 %v46
    %v73 = vunpack.c.l.b16 %v47
    %v74 = vunpack.c.l.b16 %v48
    %v75 = vunpack.c.l.b16 %v49
    %v76 = vunpack.c.l.b16 %v50
    %v77 = vunpack.c.l.b16 %v51
    %v78 = vpack.c.b16 %v71, %v70
    %v79 = vpack.c.b16 %v73, %v72
    %v80 = vpack.c.b16 %v75, %v74
    %v81 = vpack.c.b16 %v77, %v76
    %vm86 = vcmask 523264
    %v88 = vsel %vm86, %v60, 0
    %v91 = vsel %vm86, %v61, 0
    %93 = vmatpush.bf16.msra.mxu0 0
    %94 = vmatpush.bf16.msra.mxu0 0
    %95 = vmatpush.bf16.msra.mxu0 0
    %96 = vmatpush.bf16.msra.mxu0 0
    %97 = vmatpush.bf16.msra.mxu0 %v81
    %98 = vmatpush.bf16.msra.mxu0 %v80
    %99 = vmatpush.bf16.msra.mxu0 %v79
    %100 = vmatpush.bf16.msra.mxu0 %v78
    %101 = vmatmul.bf16.gmra.mxu0 %v88
    %v102 = vpop.f32.mrf.mxu0
    %v103 = vadd.f32 0.0, %v102
    %v104 = vpop.f32.mrf.mxu0
    %v105 = vadd.f32 0.0, %v104
    %106 = vmatmul.bf16.gmra.mxu0 %v91
    %v107 = vpop.f32.mrf.mxu0
    %v108 = vadd.f32 0.0, %v107
    %v109 = vpop.f32.mrf.mxu0
    %v110 = vadd.f32 0.0, %v109
    %111 = vdwg.mxu0
    %v112 = vmax.f32 %v103, %v105
    %v113 = vmax.f32 %v108, %v110
    %v114 = vmax.f32 %v112, %v113
    %v115 = vld [vmem:[%s2] sm:$0xff]
    %117 = vset.pattern.permute.xlu0 0
    %118 = vperm.xlu0 %117, %v115
    %v119 = vpop.permute.xlu0 %118
    %v121 = vadd.f32 %v114, %v119
    %v122 = vtanh.pop %v121
    %v123 = vld [vmem:[%s4] sm:$0xf]
    %v124 = vld [vmem:[%s4 + $0x4] sm:$0xf]
    %v125 = vld [vmem:[%s4 + $0x8] sm:$0xf]
    %v126 = vld [vmem:[%s4 + $0xc] sm:$0xf]
    %v127 = vld [vmem:[%s3] sm:$0xf]
    %v128 = vld [vmem:[%s3 + $0x4] sm:$0xf]
    %v129 = vld [vmem:[%s3 + $0x8] sm:$0xf]
    %v130 = vld [vmem:[%s3 + $0xc] sm:$0xf]
    %v131 = vld [vmem:[%s3 + $0x10] sm:$0xf]
    %v132 = vld [vmem:[%s3 + $0x14] sm:$0xf]
    %v133 = vld [vmem:[%s3 + $0x18] sm:$0xf]
    %v134 = vld [vmem:[%s3 + $0x1c] sm:$0xf]
    %v139 = vunpack.c.l.b16 %v123
    %v140 = vunpack.c.l.b16 %v124
    %v141 = vunpack.c.l.b16 %v125
    %v142 = vunpack.c.l.b16 %v126
    %v143 = vpack.c.b16 %v140, %v139
    %v144 = vpack.c.b16 %v142, %v141
    %v153 = vunpack.c.l.b16 %v127
    %v154 = vunpack.c.l.b16 %v128
    %v155 = vunpack.c.l.b16 %v129
    %v156 = vunpack.c.l.b16 %v130
    %v157 = vunpack.c.l.b16 %v131
    %v158 = vunpack.c.l.b16 %v132
    %v159 = vunpack.c.l.b16 %v133
    %v160 = vunpack.c.l.b16 %v134
    %v161 = vpack.c.b16 %v154, %v153
    %v162 = vpack.c.b16 %v156, %v155
    %v163 = vpack.c.b16 %v158, %v157
    %v164 = vpack.c.b16 %v160, %v159
    %v170 = vsel %vm86, %v143, 0
    %v173 = vsel %vm86, %v144, 0
    %175 = vmatpush.bf16.msra.mxu0 0
    %176 = vmatpush.bf16.msra.mxu0 0
    %177 = vmatpush.bf16.msra.mxu0 0
    %178 = vmatpush.bf16.msra.mxu0 0
    %179 = vmatpush.bf16.msra.mxu0 %v164
    %180 = vmatpush.bf16.msra.mxu0 %v163
    %181 = vmatpush.bf16.msra.mxu0 %v162
    %182 = vmatpush.bf16.msra.mxu0 %v161
    %183 = vmatmul.bf16.gmra.mxu0 %v170
    %v184 = vpop.f32.mrf.mxu0
    %v185 = vadd.f32 0.0, %v184
    %v186 = vpop.f32.mrf.mxu0
    %v187 = vadd.f32 0.0, %v186
    %188 = vmatmul.bf16.gmra.mxu0 %v173
    %v189 = vpop.f32.mrf.mxu0
    %v190 = vadd.f32 0.0, %v189
    %v191 = vpop.f32.mrf.mxu0
    %v192 = vadd.f32 0.0, %v191
    %193 = vdwg.mxu0
    %v194 = vmax.f32 %v185, %v187
    %v195 = vmax.f32 %v190, %v192
    %v196 = vmax.f32 %v194, %v195
    %v197 = vld [vmem:[%s5] sm:$0xff]
    %199 = vset.pattern.permute.xlu0 0
    %200 = vperm.xlu0 %199, %v197
    %v201 = vpop.permute.xlu0 %200
    %v203 = vadd.f32 %v196, %v201
    %v204 = vtanh.pop %v203
    %v205 = vpack.c.bf16 %v122, %v122
    %v206 = vld [vmem:[%s6] sm:$0xff]
    %v207 = vld [vmem:[%s6 + $0x8] sm:$0xff]
    %v208 = vld [vmem:[%s6 + $0x10] sm:$0xff]
    %v209 = vld [vmem:[%s6 + $0x18] sm:$0xff]
    %v210 = vld [vmem:[%s6 + $0x20] sm:$0xff]
    %v211 = vld [vmem:[%s6 + $0x28] sm:$0xff]
    %v212 = vld [vmem:[%s6 + $0x30] sm:$0xff]
    %v213 = vld [vmem:[%s6 + $0x38] sm:$0xff]
    %v214 = vld [vmem:[%s6 + $0x40] sm:$0xff]
    %v215 = vld [vmem:[%s6 + $0x48] sm:$0xff]
    %v216 = vld [vmem:[%s6 + $0x50] sm:$0xff]
    %v217 = vld [vmem:[%s6 + $0x58] sm:$0xff]
    %v218 = vld [vmem:[%s6 + $0x60] sm:$0xff]
    %v219 = vld [vmem:[%s6 + $0x68] sm:$0x33]
    %v234 = vunpack.c.l.b16 %v206
    %v235 = vunpack.c.h.b16 %v206
    %v236 = vunpack.c.l.b16 %v207
    %v237 = vunpack.c.h.b16 %v207
    %v238 = vunpack.c.l.b16 %v208
    %v239 = vunpack.c.h.b16 %v208
    %v240 = vunpack.c.l.b16 %v209
    %v241 = vunpack.c.h.b16 %v209
    %v242 = vunpack.c.l.b16 %v210
    %v243 = vunpack.c.h.b16 %v210
    %v244 = vunpack.c.l.b16 %v211
    %v245 = vunpack.c.h.b16 %v211
    %v246 = vunpack.c.l.b16 %v212
    %v247 = vunpack.c.h.b16 %v212
    %v248 = vunpack.c.l.b16 %v213
    %v249 = vunpack.c.h.b16 %v213
    %v250 = vunpack.c.l.b16 %v214
    %v251 = vunpack.c.h.b16 %v214
    %v252 = vunpack.c.l.b16 %v215
    %v253 = vunpack.c.h.b16 %v215
    %v254 = vunpack.c.l.b16 %v216
    %v255 = vunpack.c.h.b16 %v216
    %v256 = vunpack.c.l.b16 %v217
    %v257 = vunpack.c.h.b16 %v217
    %v258 = vunpack.c.l.b16 %v218
    %v259 = vunpack.c.h.b16 %v218
    %v260 = vunpack.c.l.b16 %v219
    %v261 = vunpack.c.h.b16 %v219
    %v262 = vpack.c.b16 %v236, %v234
    %v263 = vpack.c.b16 %v237, %v235
    %v264 = vpack.c.b16 %v240, %v238
    %v265 = vpack.c.b16 %v241, %v239
    %v266 = vpack.c.b16 %v244, %v242
    %v267 = vpack.c.b16 %v245, %v243
    %v268 = vpack.c.b16 %v248, %v246
    %v269 = vpack.c.b16 %v249, %v247
    %v270 = vpack.c.b16 %v252, %v250
    %v271 = vpack.c.b16 %v253, %v251
    %v272 = vpack.c.b16 %v256, %v254
    %v273 = vpack.c.b16 %v257, %v255
    %v274 = vpack.c.b16 %v260, %v258
    %v275 = vpack.c.b16 %v261, %v259
    %vm288 = vcmask 883712
    %v290 = vsel %vm288, %v205, 0
    %vm292 = vcmask 1045504
    %v294 = vsel %vm292, %v274, 0
    %v297 = vsel %vm292, %v275, 0
    %299 = vmatpush.bf16.msra.mxu0 0
    %300 = vmatpush.bf16.msra.mxu0 %v294
    %301 = vmatpush.bf16.msra.mxu0 %v272
    %302 = vmatpush.bf16.msra.mxu0 %v270
    %303 = vmatpush.bf16.msra.mxu0 %v268
    %304 = vmatpush.bf16.msra.mxu0 %v266
    %305 = vmatpush.bf16.msra.mxu0 %v264
    %306 = vmatpush.bf16.msra.mxu0 %v262
    %307 = vmatmul.bf16.gmra.mxu0 %v290
    %v308 = vpop.f32.mrf.mxu0
    %v309 = vadd.f32 0.0, %v308
    %v310 = vpop.f32.mrf.mxu0
    %311 = vdwg.mxu0
    %312 = vmatpush.bf16.msra.mxu0 0
    %313 = vmatpush.bf16.msra.mxu0 %v297
    %314 = vmatpush.bf16.msra.mxu0 %v273
    %315 = vmatpush.bf16.msra.mxu0 %v271
    %316 = vmatpush.bf16.msra.mxu0 %v269
    %317 = vmatpush.bf16.msra.mxu0 %v267
    %318 = vmatpush.bf16.msra.mxu0 %v265
    %319 = vmatpush.bf16.msra.mxu0 %v263
    %320 = vmatmul.bf16.gmra.mxu0 %v290
    %v321 = vpop.f32.mrf.mxu0
    %v322 = vadd.f32 0.0, %v321
    %v323 = vpop.f32.mrf.mxu0
    %324 = vdwg.mxu0
    %v325 = vpack.c.bf16 %v204, %v204
    %v326 = vld [vmem:[%s7] sm:$0xff]
    %v327 = vld [vmem:[%s7 + $0x8] sm:$0xff]
    %v328 = vld [vmem:[%s7 + $0x10] sm:$0xff]
    %v329 = vld [vmem:[%s7 + $0x18] sm:$0xff]
    %v330 = vld [vmem:[%s7 + $0x20] sm:$0xff]
    %v331 = vld [vmem:[%s7 + $0x28] sm:$0xff]
    %v332 = vld [vmem:[%s7 + $0x30] sm:$0xff]
    %v333 = vld [vmem:[%s7 + $0x38] sm:$0xff]
    %v334 = vld [vmem:[%s7 + $0x40] sm:$0xff]
    %v335 = vld [vmem:[%s7 + $0x48] sm:$0xff]
    %v336 = vld [vmem:[%s7 + $0x50] sm:$0xff]
    %v337 = vld [vmem:[%s7 + $0x58] sm:$0xff]
    %v338 = vld [vmem:[%s7 + $0x60] sm:$0xff]
    %v339 = vld [vmem:[%s7 + $0x68] sm:$0x33]
    %v354 = vunpack.c.l.b16 %v326
    %v355 = vunpack.c.h.b16 %v326
    %v356 = vunpack.c.l.b16 %v327
    %v357 = vunpack.c.h.b16 %v327
    %v358 = vunpack.c.l.b16 %v328
    %v359 = vunpack.c.h.b16 %v328
    %v360 = vunpack.c.l.b16 %v329
    %v361 = vunpack.c.h.b16 %v329
    %v362 = vunpack.c.l.b16 %v330
    %v363 = vunpack.c.h.b16 %v330
    %v364 = vunpack.c.l.b16 %v331
    %v365 = vunpack.c.h.b16 %v331
    %v366 = vunpack.c.l.b16 %v332
    %v367 = vunpack.c.h.b16 %v332
    %v368 = vunpack.c.l.b16 %v333
    %v369 = vunpack.c.h.b16 %v333
    %v370 = vunpack.c.l.b16 %v334
    %v371 = vunpack.c.h.b16 %v334
    %v372 = vunpack.c.l.b16 %v335
    %v373 = vunpack.c.h.b16 %v335
    %v374 = vunpack.c.l.b16 %v336
    %v375 = vunpack.c.h.b16 %v336
    %v376 = vunpack.c.l.b16 %v337
    %v377 = vunpack.c.h.b16 %v337
    %v378 = vunpack.c.l.b16 %v338
    %v379 = vunpack.c.h.b16 %v338
    %v380 = vunpack.c.l.b16 %v339
    %v381 = vunpack.c.h.b16 %v339
    %v382 = vpack.c.b16 %v356, %v354
    %v383 = vpack.c.b16 %v357, %v355
    %v384 = vpack.c.b16 %v360, %v358
    %v385 = vpack.c.b16 %v361, %v359
    %v386 = vpack.c.b16 %v364, %v362
    %v387 = vpack.c.b16 %v365, %v363
    %v388 = vpack.c.b16 %v368, %v366
    %v389 = vpack.c.b16 %v369, %v367
    %v390 = vpack.c.b16 %v372, %v370
    %v391 = vpack.c.b16 %v373, %v371
    %v392 = vpack.c.b16 %v376, %v374
    %v393 = vpack.c.b16 %v377, %v375
    %v394 = vpack.c.b16 %v380, %v378
    %v395 = vpack.c.b16 %v381, %v379
    %v409 = vsel %vm288, %v325, 0
    %v412 = vsel %vm292, %v394, 0
    %v415 = vsel %vm292, %v395, 0
    %417 = vmatpush.bf16.msra.mxu0 0
    %418 = vmatpush.bf16.msra.mxu0 %v412
    %419 = vmatpush.bf16.msra.mxu0 %v392
    %420 = vmatpush.bf16.msra.mxu0 %v390
    %421 = vmatpush.bf16.msra.mxu0 %v388
    %422 = vmatpush.bf16.msra.mxu0 %v386
    %423 = vmatpush.bf16.msra.mxu0 %v384
    %424 = vmatpush.bf16.msra.mxu0 %v382
    %425 = vmatmul.bf16.gmra.mxu0 %v409
    %v426 = vpop.f32.mrf.mxu0
    %v427 = vadd.f32 0.0, %v426
    %v428 = vpop.f32.mrf.mxu0
    %429 = vdwg.mxu0
    %430 = vmatpush.bf16.msra.mxu0 0
    %431 = vmatpush.bf16.msra.mxu0 %v415
    %432 = vmatpush.bf16.msra.mxu0 %v393
    %433 = vmatpush.bf16.msra.mxu0 %v391
    %434 = vmatpush.bf16.msra.mxu0 %v389
    %435 = vmatpush.bf16.msra.mxu0 %v387
    %436 = vmatpush.bf16.msra.mxu0 %v385
    %437 = vmatpush.bf16.msra.mxu0 %v383
    %438 = vmatmul.bf16.gmra.mxu0 %v409
    %v439 = vpop.f32.mrf.mxu0
    %v440 = vadd.f32 0.0, %v439
    %v441 = vpop.f32.mrf.mxu0
    %442 = vdwg.mxu0
    %v443 = vld [vmem:[%s8] sm:$0x1]
    %v444 = vadd.f32 %v443, %v309
    %v445 = vadd.f32 %v444, %v427
    %447 = vst [vmem:[#allocation1] sm:$0xff] %v309
    %s448 = scalar_lea.vmem [#allocation1], 1
    %v449 = vld [vmem:[%s448] ss:$9 sm:$0xff]
    %450 = vrot.lane.b32.xlu0 %v449, 96
    %v451 = vpop.permute.xlu0 %450
    %v453 = vadd.f32 %v445, %v451
    %455 = vst [vmem:[#allocation1] sm:$0xff] %v427
    %s456 = scalar_lea.vmem [#allocation1], 1
    %v457 = vld [vmem:[%s456] ss:$9 sm:$0xff]
    %458 = vrot.lane.b32.xlu0 %v457, 96
    %v459 = vpop.permute.xlu0 %458
    %v461 = vadd.f32 %v453, %v459
    %462 = vst [vmem:[#allocation1] sm:$0xff] %v309
    %s463 = scalar_lea.vmem [#allocation1], 2
    %v464 = vld [vmem:[%s463] ss:$9 sm:$0xff]
    %465 = vrot.lane.b32.xlu0 %v464, 64
    %v466 = vpop.permute.xlu0 %465
    %v468 = vadd.f32 %v461, %v466
    %469 = vst [vmem:[#allocation1] sm:$0xff] %v427
    %s470 = scalar_lea.vmem [#allocation1], 2
    %v471 = vld [vmem:[%s470] ss:$9 sm:$0xff]
    %472 = vrot.lane.b32.xlu0 %v471, 64
    %v473 = vpop.permute.xlu0 %472
    %v475 = vadd.f32 %v468, %v473
    %476 = vst [vmem:[#allocation1] sm:$0xff] %v309
    %s477 = scalar_lea.vmem [#allocation1], 3
    %v478 = vld [vmem:[%s477] ss:$9 sm:$0xff]
    %479 = vrot.lane.b32.xlu0 %v478, 32
    %v480 = vpop.permute.xlu0 %479
    %v482 = vadd.f32 %v475, %v480
    %483 = vst [vmem:[#allocation1] sm:$0xff] %v427
    %s484 = scalar_lea.vmem [#allocation1], 3
    %v485 = vld [vmem:[%s484] ss:$9 sm:$0xff]
    %486 = vrot.lane.b32.xlu0 %v485, 32
    %v487 = vpop.permute.xlu0 %486
    %v489 = vadd.f32 %v482, %v487
    %491 = vst [vmem:[#allocation1] sm:$0xff] %v322
    %s492 = scalar_lea.vmem [#allocation1], 4
    %v493 = vld [vmem:[%s492] ss:$9 sm:$0xff]
    %v495 = vadd.f32 %v489, %v493
    %497 = vst [vmem:[#allocation1] sm:$0xff] %v440
    %s498 = scalar_lea.vmem [#allocation1], 4
    %v499 = vld [vmem:[%s498] ss:$9 sm:$0xff]
    %v501 = vadd.f32 %v495, %v499
    %502 = vst [vmem:[#allocation1] sm:$0xff] %v322
    %s503 = scalar_lea.vmem [#allocation1], 5
    %v504 = vld [vmem:[%s503] ss:$9 sm:$0xff]
    %505 = vrot.lane.b32.xlu0 %v504, 96
    %v506 = vpop.permute.xlu0 %505
    %v508 = vadd.f32 %v501, %v506
    %509 = vst [vmem:[#allocation1] sm:$0xff] %v440
    %s510 = scalar_lea.vmem [#allocation1], 5
    %v511 = vld [vmem:[%s510] ss:$9 sm:$0xff]
    %512 = vrot.lane.b32.xlu0 %v511, 96
    %v513 = vpop.permute.xlu0 %512
    %v515 = vadd.f32 %v508, %v513
    %516 = vst [vmem:[#allocation1] sm:$0xff] %v322
    %s517 = scalar_lea.vmem [#allocation1], 6
    %v518 = vld [vmem:[%s517] ss:$9 sm:$0xff]
    %519 = vrot.lane.b32.xlu0 %v518, 64
    %v520 = vpop.permute.xlu0 %519
    %v522 = vadd.f32 %v515, %v520
    %523 = vst [vmem:[#allocation1] sm:$0xff] %v440
    %s524 = scalar_lea.vmem [#allocation1], 6
    %v525 = vld [vmem:[%s524] ss:$9 sm:$0xff]
    %526 = vrot.lane.b32.xlu0 %v525, 64
    %v527 = vpop.permute.xlu0 %526
    %v529 = vadd.f32 %v522, %v527
    %530 = vst [vmem:[#allocation1] sm:$0xff] %v322
    %s531 = scalar_lea.vmem [#allocation1], 7
    %v532 = vld [vmem:[%s531] ss:$9 sm:$0xff]
    %533 = vrot.lane.b32.xlu0 %v532, 32
    %v534 = vpop.permute.xlu0 %533
    %v536 = vadd.f32 %v529, %v534
    %537 = vst [vmem:[#allocation1] sm:$0xff] %v440
    %s538 = scalar_lea.vmem [#allocation1], 7
    %v539 = vld [vmem:[%s538] ss:$9 sm:$0xff]
    %540 = vrot.lane.b32.xlu0 %v539, 32
    %v541 = vpop.permute.xlu0 %540
    %v543 = vadd.f32 %v536, %v541
    %s544 = scalar_lea.vmem %s0, 32
    %v545 = vld [vmem:[%s544] sm:$0xf]
    %v546 = vld [vmem:[%s544 + $0x4] sm:$0xf]
    %v547 = vld [vmem:[%s544 + $0x8] sm:$0xf]
    %v548 = vld [vmem:[%s544 + $0xc] sm:$0xf]
    %v549 = vld [vmem:[%s544 + $0x10] sm:$0xf]
    %v550 = vld [vmem:[%s544 + $0x14] sm:$0xf]
    %v551 = vld [vmem:[%s544 + $0x18] sm:$0xf]
    %v552 = vld [vmem:[%s544 + $0x1c] sm:$0xf]
    %v561 = vunpack.c.l.b16 %v545
    %v562 = vunpack.c.l.b16 %v546
    %v563 = vunpack.c.l.b16 %v547
    %v564 = vunpack.c.l.b16 %v548
    %v565 = vunpack.c.l.b16 %v549
    %v566 = vunpack.c.l.b16 %v550
    %v567 = vunpack.c.l.b16 %v551
    %v568 = vunpack.c.l.b16 %v552
    %v569 = vpack.c.b16 %v562, %v561
    %v570 = vpack.c.b16 %v564, %v563
    %v571 = vpack.c.b16 %v566, %v565
    %v572 = vpack.c.b16 %v568, %v567
    %577 = vmatpush.bf16.msra.mxu0 0
    %578 = vmatpush.bf16.msra.mxu0 0
    %579 = vmatpush.bf16.msra.mxu0 0
    %580 = vmatpush.bf16.msra.mxu0 0
    %581 = vmatpush.bf16.msra.mxu0 %v572
    %582 = vmatpush.bf16.msra.mxu0 %v571
    %583 = vmatpush.bf16.msra.mxu0 %v570
    %584 = vmatpush.bf16.msra.mxu0 %v569
    %585 = vmatmul.bf16.gmra.mxu0 %v88
    %v586 = vpop.f32.mrf.mxu0
    %v587 = vadd.f32 0.0, %v586
    %v588 = vpop.f32.mrf.mxu0
    %v589 = vadd.f32 0.0, %v588
    %590 = vmatmul.bf16.gmra.mxu0 %v91
    %v591 = vpop.f32.mrf.mxu0
    %v592 = vadd.f32 0.0, %v591
    %v593 = vpop.f32.mrf.mxu0
    %v594 = vadd.f32 0.0, %v593
    %595 = vdwg.mxu0
    %v596 = vmax.f32 %v587, %v589
    %v597 = vmax.f32 %v592, %v594
    %v598 = vmax.f32 %v596, %v597
    %v599 = vadd.f32 %v598, %v119
    %v600 = vtanh.pop %v599
    %s601 = scalar_lea.vmem %s3, 32
    %v602 = vld [vmem:[%s601] sm:$0xf]
    %v603 = vld [vmem:[%s601 + $0x4] sm:$0xf]
    %v604 = vld [vmem:[%s601 + $0x8] sm:$0xf]
    %v605 = vld [vmem:[%s601 + $0xc] sm:$0xf]
    %v606 = vld [vmem:[%s601 + $0x10] sm:$0xf]
    %v607 = vld [vmem:[%s601 + $0x14] sm:$0xf]
    %v608 = vld [vmem:[%s601 + $0x18] sm:$0xf]
    %v609 = vld [vmem:[%s601 + $0x1c] sm:$0xf]
    %v618 = vunpack.c.l.b16 %v602
    %v619 = vunpack.c.l.b16 %v603
    %v620 = vunpack.c.l.b16 %v604
    %v621 = vunpack.c.l.b16 %v605
    %v622 = vunpack.c.l.b16 %v606
    %v623 = vunpack.c.l.b16 %v607
    %v624 = vunpack.c.l.b16 %v608
    %v625 = vunpack.c.l.b16 %v609
    %v626 = vpack.c.b16 %v619, %v618
    %v627 = vpack.c.b16 %v621, %v620
    %v628 = vpack.c.b16 %v623, %v622
    %v629 = vpack.c.b16 %v625, %v624
    %634 = vmatpush.bf16.msra.mxu0 0
    %635 = vmatpush.bf16.msra.mxu0 0
    %636 = vmatpush.bf16.msra.mxu0 0
    %637 = vmatpush.bf16.msra.mxu0 0
    %638 = vmatpush.bf16.msra.mxu0 %v629
    %639 = vmatpush.bf16.msra.mxu0 %v628
    %640 = vmatpush.bf16.msra.mxu0 %v627
    %641 = vmatpush.bf16.msra.mxu0 %v626
    %642 = vmatmul.bf16.gmra.mxu0 %v170
    %v643 = vpop.f32.mrf.mxu0
    %v644 = vadd.f32 0.0, %v643
    %v645 = vpop.f32.mrf.mxu0
    %v646 = vadd.f32 0.0, %v645
    %647 = vmatmul.bf16.gmra.mxu0 %v173
    %v648 = vpop.f32.mrf.mxu0
    %v649 = vadd.f32 0.0, %v648
    %v650 = vpop.f32.mrf.mxu0
    %v651 = vadd.f32 0.0, %v650
    %652 = vdwg.mxu0
    %v653 = vmax.f32 %v644, %v646
    %v654 = vmax.f32 %v649, %v651
    %v655 = vmax.f32 %v653, %v654
    %v656 = vadd.f32 %v655, %v201
    %v657 = vtanh.pop %v656
    %v658 = vpack.c.bf16 %v600, %v600
    %v660 = vsel %vm288, %v658, 0
    %662 = vmatpush.bf16.msra.mxu0 0
    %663 = vmatpush.bf16.msra.mxu0 %v294
    %664 = vmatpush.bf16.msra.mxu0 %v272
    %665 = vmatpush.bf16.msra.mxu0 %v270
    %666 = vmatpush.bf16.msra.mxu0 %v268
    %667 = vmatpush.bf16.msra.mxu0 %v266
    %668 = vmatpush.bf16.msra.mxu0 %v264
    %669 = vmatpush.bf16.msra.mxu0 %v262
    %670 = vmatmul.bf16.gmra.mxu0 %v660
    %v671 = vpop.f32.mrf.mxu0
    %v672 = vadd.f32 0.0, %v671
    %v673 = vpop.f32.mrf.mxu0
    %674 = vdwg.mxu0
    %675 = vmatpush.bf16.msra.mxu0 0
    %676 = vmatpush.bf16.msra.mxu0 %v297
    %677 = vmatpush.bf16.msra.mxu0 %v273
    %678 = vmatpush.bf16.msra.mxu0 %v271
    %679 = vmatpush.bf16.msra.mxu0 %v269
    %680 = vmatpush.bf16.msra.mxu0 %v267
    %681 = vmatpush.bf16.msra.mxu0 %v265
    %682 = vmatpush.bf16.msra.mxu0 %v263
    %683 = vmatmul.bf16.gmra.mxu0 %v660
    %v684 = vpop.f32.mrf.mxu0
    %v685 = vadd.f32 0.0, %v684
    %v686 = vpop.f32.mrf.mxu0
    %687 = vdwg.mxu0
    %v688 = vpack.c.bf16 %v657, %v657
    %v690 = vsel %vm288, %v688, 0
    %692 = vmatpush.bf16.msra.mxu0 0
    %693 = vmatpush.bf16.msra.mxu0 %v412
    %694 = vmatpush.bf16.msra.mxu0 %v392
    %695 = vmatpush.bf16.msra.mxu0 %v390
    %696 = vmatpush.bf16.msra.mxu0 %v388
    %697 = vmatpush.bf16.msra.mxu0 %v386
    %698 = vmatpush.bf16.msra.mxu0 %v384
    %699 = vmatpush.bf16.msra.mxu0 %v382
    %700 = vmatmul.bf16.gmra.mxu0 %v690
    %v701 = vpop.f32.mrf.mxu0
    %v702 = vadd.f32 0.0, %v701
    %v703 = vpop.f32.mrf.mxu0
    %704 = vdwg.mxu0
    %705 = vmatpush.bf16.msra.mxu0 0
    %706 = vmatpush.bf16.msra.mxu0 %v415
    %707 = vmatpush.bf16.msra.mxu0 %v393
    %708 = vmatpush.bf16.msra.mxu0 %v391
    %709 = vmatpush.bf16.msra.mxu0 %v389
    %710 = vmatpush.bf16.msra.mxu0 %v387
    %711 = vmatpush.bf16.msra.mxu0 %v385
    %712 = vmatpush.bf16.msra.mxu0 %v383
    %713 = vmatmul.bf16.gmra.mxu0 %v690
    %v714 = vpop.f32.mrf.mxu0
    %v715 = vadd.f32 0.0, %v714
    %v716 = vpop.f32.mrf.mxu0
    %717 = vdwg.mxu0
    %v718 = vadd.f32 %v443, %v672
    %v719 = vadd.f32 %v718, %v702
    %721 = vst [vmem:[#allocation1] sm:$0xff] %v672
    %s722 = scalar_lea.vmem [#allocation1], 1
    %v723 = vld [vmem:[%s722] ss:$9 sm:$0xff]
    %724 = vrot.lane.b32.xlu0 %v723, 96
    %v725 = vpop.permute.xlu0 %724
    %v727 = vadd.f32 %v719, %v725
    %729 = vst [vmem:[#allocation1] sm:$0xff] %v702
    %s730 = scalar_lea.vmem [#allocation1], 1
    %v731 = vld [vmem:[%s730] ss:$9 sm:$0xff]
    %732 = vrot.lane.b32.xlu0 %v731, 96
    %v733 = vpop.permute.xlu0 %732
    %v735 = vadd.f32 %v727, %v733
    %736 = vst [vmem:[#allocation1] sm:$0xff] %v672
    %s737 = scalar_lea.vmem [#allocation1], 2
    %v738 = vld [vmem:[%s737] ss:$9 sm:$0xff]
    %739 = vrot.lane.b32.xlu0 %v738, 64
    %v740 = vpop.permute.xlu0 %739
    %v742 = vadd.f32 %v735, %v740
    %743 = vst [vmem:[#allocation1] sm:$0xff] %v702
    %s744 = scalar_lea.vmem [#allocation1], 2
    %v745 = vld [vmem:[%s744] ss:$9 sm:$0xff]
    %746 = vrot.lane.b32.xlu0 %v745, 64
    %v747 = vpop.permute.xlu0 %746
    %v749 = vadd.f32 %v742, %v747
    %750 = vst [vmem:[#allocation1] sm:$0xff] %v672
    %s751 = scalar_lea.vmem [#allocation1], 3
    %v752 = vld [vmem:[%s751] ss:$9 sm:$0xff]
    %753 = vrot.lane.b32.xlu0 %v752, 32
    %v754 = vpop.permute.xlu0 %753
    %v756 = vadd.f32 %v749, %v754
    %757 = vst [vmem:[#allocation1] sm:$0xff] %v702
    %s758 = scalar_lea.vmem [#allocation1], 3
    %v759 = vld [vmem:[%s758] ss:$9 sm:$0xff]
    %760 = vrot.lane.b32.xlu0 %v759, 32
    %v761 = vpop.permute.xlu0 %760
    %v763 = vadd.f32 %v756, %v761
    %765 = vst [vmem:[#allocation1] sm:$0xff] %v685
    %s766 = scalar_lea.vmem [#allocation1], 4
    %v767 = vld [vmem:[%s766] ss:$9 sm:$0xff]
    %v769 = vadd.f32 %v763, %v767
    %771 = vst [vmem:[#allocation1] sm:$0xff] %v715
    %s772 = scalar_lea.vmem [#allocation1], 4
    %v773 = vld [vmem:[%s772] ss:$9 sm:$0xff]
    %v775 = vadd.f32 %v769, %v773
    %776 = vst [vmem:[#allocation1] sm:$0xff] %v685
    %s777 = scalar_lea.vmem [#allocation1], 5
    %v778 = vld [vmem:[%s777] ss:$9 sm:$0xff]
    %779 = vrot.lane.b32.xlu0 %v778, 96
    %v780 = vpop.permute.xlu0 %779
    %v782 = vadd.f32 %v775, %v780
    %783 = vst [vmem:[#allocation1] sm:$0xff] %v715
    %s784 = scalar_lea.vmem [#allocation1], 5
    %v785 = vld [vmem:[%s784] ss:$9 sm:$0xff]
    %786 = vrot.lane.b32.xlu0 %v785, 96
    %v787 = vpop.permute.xlu0 %786
    %v789 = vadd.f32 %v782, %v787
    %790 = vst [vmem:[#allocation1] sm:$0xff] %v685
    %s791 = scalar_lea.vmem [#allocation1], 6
    %v792 = vld [vmem:[%s791] ss:$9 sm:$0xff]
    %793 = vrot.lane.b32.xlu0 %v792, 64
    %v794 = vpop.permute.xlu0 %793
    %v796 = vadd.f32 %v789, %v794
    %797 = vst [vmem:[#allocation1] sm:$0xff] %v715
    %s798 = scalar_lea.vmem [#allocation1], 6
    %v799 = vld [vmem:[%s798] ss:$9 sm:$0xff]
    %800 = vrot.lane.b32.xlu0 %v799, 64
    %v801 = vpop.permute.xlu0 %800
    %v803 = vadd.f32 %v796, %v801
    %804 = vst [vmem:[#allocation1] sm:$0xff] %v685
    %s805 = scalar_lea.vmem [#allocation1], 7
    %v806 = vld [vmem:[%s805] ss:$9 sm:$0xff]
    %807 = vrot.lane.b32.xlu0 %v806, 32
    %v808 = vpop.permute.xlu0 %807
    %v810 = vadd.f32 %v803, %v808
    %811 = vst [vmem:[#allocation1] sm:$0xff] %v715
    %s812 = scalar_lea.vmem [#allocation1], 7
    %v813 = vld [vmem:[%s812] ss:$9 sm:$0xff]
    %814 = vrot.lane.b32.xlu0 %v813, 32
    %v815 = vpop.permute.xlu0 %814
    %v817 = vadd.f32 %v810, %v815
    %v819 = vperm.slane %v817, 0
    %vm821 = vcmask 1040384
    %v822 = vsel %vm821, %v543, %v819
    %v823 = vpack.c.bf16 %v822, %v822
    %v824 = vld [vmem:[%s9] sm:$0xf]
    %v825 = vld [vmem:[%s9 + $0x4] sm:$0xf]
    %v826 = vld [vmem:[%s9 + $0x8] sm:$0xf]
    %v827 = vld [vmem:[%s9 + $0xc] sm:$0xf]
    %v828 = vld [vmem:[%s10] sm:$0x1]
    %v830 = vperm.slane %v828, 0
    %v836 = vunpack.c.l.b16 %v824
    %v837 = vunpack.c.l.b16 %v825
    %v838 = vunpack.c.l.b16 %v826
    %v839 = vunpack.c.l.b16 %v827
    %v840 = vpack.c.b16 %v837, %v836
    %v841 = vpack.c.b16 %v839, %v838
    %vm844 = vcmask 261120
    %v846 = vsel %vm844, %v823, 0
    %848 = vmatpush.bf16.msra.mxu0 0
    %849 = vmatpush.bf16.msra.mxu0 0
    %850 = vmatpush.bf16.msra.mxu0 0
    %851 = vmatpush.bf16.msra.mxu0 0
    %852 = vmatpush.bf16.msra.mxu0 0
    %853 = vmatpush.bf16.msra.mxu0 0
    %854 = vmatpush.bf16.msra.mxu0 %v841
    %855 = vmatpush.bf16.msra.mxu0 %v840
    %856 = vmatmul.bf16.gmra.mxu0 %v846
    %v857 = vpop.f32.mrf.mxu0
    %v858 = vadd.f32 %v830, %v857
    %v859 = vpop.f32.mrf.mxu0
    %860 = vdwg.mxu0
    %vm861 = vcmask 91136
    %862 = vst.msk [vmem:[#allocation2] sm:$0x3] %vm861, %v858
    // Predicated region
    $region46: #{total_module_forward.1} parent=1 // pred_check
      _
    $region47: #{total_module_forward.1} parent=1 // pred_check_branch
      %864 = sbr.rel (0) target = $region49
    $region48: #{total_module_forward.1} parent=1 // pred_region
      %866 = vsyncadd [#allocation3], 0
      %s868 = sshll.u32 [#allocation2], 4
      %s869 = int_to_ptr.vmem [resolvable:$true] %s868
      %s870 = sshll.u32 %s11, 4
      %s871 = int_to_ptr.hbm [resolvable:$true] %s870
      %873 = dma.vmem_to_hbm [thread:$0]  %s869, 32, %s871, [#allocation3]
    $region49: #{total_module_forward.1} parent=1 // pred_fallthru
      _
    // Predicated region
    $region50: #{total_module_forward.1} parent=1 // pred_check
      _
    $region51: #{total_module_forward.1} parent=1 // pred_check_branch
      %875 = sbr.rel (0) target = $region53
    $region52: #{total_module_forward.1} parent=1 // pred_region
      %877 = dma.done [#allocation3], 32
    $region53: #{total_module_forward.1} parent=1 // pred_fallthru
      _
    %878 = vsyncpa [#allocation3], 1

</llo_original>
